<compile_context>
chip_gen: v7x
topology: tpu7x:2x2x1
jax: 0.10.0
libtpu: 0.0.40
codegen_flags: <defaults>
</compile_context>

<pallas_src>
import math
from functools import partial

import jax
import jax.numpy as jnp
from jax.experimental import pallas as pl
from jax.experimental.pallas import tpu as pltpu

_LANE = 128


def _cdiv(a, b):
    return (a + b - 1) // b


def _round_up(x, m):
    return _cdiv(x, m) * m


def _qnet_kernel(s_ref, a_ref, w1_ref, b1_ref, w2_ref, b2_ref, w3_ref, b3_ref,
                 o_ref, x_ref, *, act_offset):
    """One batch tile of the 3-layer MLP.

    s_ref:(tb,S) fp32   a_ref:(tb,A) fp32
    w1_ref:(K1,H1) cdt  packed: rows [0,S)=W1_state, [act_offset,act_offset+A)=W1_action, rest 0
    b1_ref:(1,H1) fp32  w2_ref:(H1,H2) cdt  b2_ref:(1,H2) fp32
    w3_ref:(1,H2) fp32  b3_ref:(1,) fp32 (SMEM)
    o_ref:(1,tb) fp32   x_ref:(tb,K1) cdt VMEM scratch
    """
    cdt = x_ref.dtype
    S = s_ref.shape[1]
    A = a_ref.shape[1]

    # Fused concat: pack [state | action] along K at tile-aligned offsets.
    # Zero-fill first so the never-written padding lanes (which face all-zero
    # rows of the packed W1) cannot hold stale NaN/Inf from a previous buffer.
    x_ref[...] = jnp.zeros(x_ref.shape, x_ref.dtype)
    x_ref[:, :S] = s_ref[...].astype(cdt)                           # lanes [0, S)
    x_ref[:, act_offset:act_offset + A] = a_ref[...].astype(cdt)    # lanes [128, 128+A)

    # Layer 1: a single MXU dot over the packed K (fp32 accumulation).
    h1 = jnp.dot(x_ref[...], w1_ref[...], preferred_element_type=jnp.float32)
    h1 = jnp.maximum(h1 + b1_ref[...], 0.0)                         # ReLU (fp32)

    # Layer 2.
    h2 = jnp.dot(h1.astype(w2_ref.dtype), w2_ref[...],
                 preferred_element_type=jnp.float32)
    h2 = jnp.maximum(h2 + b2_ref[...], 0.0)                         # ReLU (fp32)

    # Layer 3 (out_features == 1): VPU multiply + lane reduction instead of an
    # N=1 MXU matmul; emitted as a lane-dense row of the output tile.
    q = jnp.sum(h2 * w3_ref[...], axis=-1) + b3_ref[0]              # (tb,)
    o_ref[...] = q[None, :].astype(o_ref.dtype)                     # (1, tb)


def _choose_tile_b(batch, tile_b):
    """Lane-aligned batch tile; prefer an even number (>=2) of tiles so the
    'parallel' grid axis can feed both v7x TensorCores."""
    tile_b = max(_LANE, (int(tile_b) // _LANE) * _LANE)
    if batch <= _LANE:
        return _LANE
    n_tiles = max(2, _cdiv(_round_up(batch, _LANE), tile_b))
    if n_tiles % 2:
        n_tiles += 1
    return max(_LANE, _round_up(_cdiv(batch, n_tiles), _LANE))


def _vmem_bytes_estimate(tb, S, A, K1, H1, H2, cdt):
    cb = jnp.dtype(cdt).itemsize
    io = 2 * tb * (S + A) * 4 + 2 * tb * 4                 # double-buffered act tiles
    weights = 2 * ((K1 * H1 + H1 * H2) * cb + (H1 + 2 * H2) * 4)
    scratch = tb * K1 * cb
    inter = tb * H1 * (4 + cb) + tb * H2 * 8               # h1 (f32 + cdt), h2 f32 + slack
    return io + weights + scratch + inter


def qnetwork_forward(state, action, params, *, tile_b=2048,
                     compute_dtype=jnp.bfloat16):
    """Fused MLP forward. state: [B, S] or [S]; action: [B, A] or [A] -> [B, 1]."""
    state = jnp.asarray(state, jnp.float32)
    action = jnp.asarray(action, jnp.float32)
    if state.ndim == 1:
        state = state[None, :]
    if action.ndim == 1:
        action = action[None, :]

    w1, b1, w2, b2, w3, b3 = params
    B, S = state.shape
    A = action.shape[1]
    H1 = w1.shape[1]
    H2 = w2.shape[1]
    cdt = compute_dtype

    # Batch tiling: cdiv grid, no wrapper-side padding of the activations.
    tb = _choose_tile_b(B, tile_b)
    num_tiles = _cdiv(B, tb)

    # Pack W1 so layer 1 is a single dot over a tile-aligned K:
    #   rows [0, S)            <- W1 rows for `state`
    #   rows [S_pad, S_pad+A)  <- W1 rows for `action`   (S_pad = round_up(S, 128))
    # all other rows are zero; the matching x lanes are zero-filled in-kernel.
    s_pad = _round_up(S, _LANE)
    a_pad = _round_up(A, _LANE)
    K1 = s_pad + a_pad
    w1p = jnp.zeros((K1, H1), cdt)
    w1p = w1p.at[:S].set(w1[:S].astype(cdt))
    w1p = w1p.at[s_pad:s_pad + A].set(w1[S:S + A].astype(cdt))

    w2c = w2.astype(cdt)
    b1r = b1.reshape(1, H1).astype(jnp.float32)
    b2r = b2.reshape(1, H2).astype(jnp.float32)
    w3r = w3.reshape(1, H2).astype(jnp.float32)
    b3r = b3.reshape(1).astype(jnp.float32)

    # Raise the scoped-VMEM limit only when the working set needs it
    # (v5e's default scoped limit is 16 MiB; v6e/v7x default to 32 MiB).
    est = _vmem_bytes_estimate(tb, S, A, K1, H1, H2, cdt)
    vmem_limit = int(min(max(2 * est, 32 << 20), 96 << 20)) if est > (12 << 20) else None

    const = lambda i: (0, 0)                             # weights stay resident
    out = pl.pallas_call(
        partial(_qnet_kernel, act_offset=s_pad),
        out_shape=jax.ShapeDtypeStruct((num_tiles, tb), jnp.float32),
        grid=(num_tiles,),
        in_specs=[
            pl.BlockSpec((tb, S), lambda i: (i, 0)),            # state tile (fp32)
            pl.BlockSpec((tb, A), lambda i: (i, 0)),            # action tile (fp32)
            pl.BlockSpec((K1, H1), const),                      # packed W1
            pl.BlockSpec((1, H1), const),                       # b1
            pl.BlockSpec((H1, H2), const),                      # W2
            pl.BlockSpec((1, H2), const),                       # b2
            pl.BlockSpec((1, H2), const),                       # W3 row
            pl.BlockSpec(memory_space=pltpu.MemorySpace.SMEM),  # b3 scalar
        ],
        out_specs=pl.BlockSpec((1, tb), lambda i: (i, 0)),      # lane-dense rows
        scratch_shapes=[pltpu.VMEM((tb, K1), cdt)],             # packed x tile
        compiler_params=pltpu.CompilerParams(
            dimension_semantics=("parallel",),                  # v7x: shard over 2 TCs
            vmem_limit_bytes=vmem_limit,
        ),
    )(state, action, w1p, b1r, w2c, b2r, w3r, b3r)

    return out.reshape(num_tiles * tb, 1)[:B]                   # [B, 1]


def init_qnetwork_params(key, state_dim, action_dim, hidden_dims=(256, 256)):
    """nn.Linear-style init (uniform +/- 1/sqrt(fan_in)).  Weights are stored
    [in_features, out_features] (transpose of PyTorch)."""
    dims = [state_dim + action_dim] + list(hidden_dims) + [1]
    params = []
    for i in range(len(dims) - 1):
        fan_in, fan_out = dims[i], dims[i + 1]
        key, kw, kb = jax.random.split(key, 3)
        bound = 1.0 / math.sqrt(fan_in)
        w = jax.random.uniform(kw, (fan_in, fan_out), jnp.float32, -bound, bound)
        b = jax.random.uniform(kb, (1, fan_out), jnp.float32, -bound, bound)
        params += [w, b]
    return tuple(params)


def qnetwork_reference(state, action, params):
    """Pure-JAX reference for correctness checking."""
    x = jnp.concatenate([jnp.atleast_2d(state), jnp.atleast_2d(action)], axis=-1)
    w1, b1, w2, b2, w3, b3 = params
    h1 = jnp.maximum(x @ w1 + b1, 0.0)
    h2 = jnp.maximum(h1 @ w2 + b2, 0.0)
    return h2 @ w3 + b3


if __name__ == "__main__":
    # Small, module-consistent shapes (MuJoCo-like dims, module-default hidden).
    batch, state_dim, action_dim = 8, 17, 6
    hidden_dims = (256, 256)

    key = jax.random.PRNGKey(0)
    kp, ks, ka = jax.random.split(key, 3)
    params = init_qnetwork_params(kp, state_dim, action_dim, hidden_dims)
    state = jax.random.normal(ks, (batch, state_dim), jnp.float32)
    action = jax.random.normal(ka, (batch, action_dim), jnp.float32)

    q_ref = qnetwork_reference(state, action, params)

    # fp32-on-MXU path: tight check.
    q32 = qnetwork_forward(state, action, params, compute_dtype=jnp.float32)
    jax.block_until_ready(q32)
    assert q32.shape == (batch, 1)
    assert jnp.allclose(q32, q_ref, atol=2e-3, rtol=2e-3), "fp32 mismatch vs reference"

    # bf16-on-MXU path (default; fp32 accumulation): looser tolerance.
    qbf = qnetwork_forward(state, action, params)
    jax.block_until_ready(qbf)
    assert qbf.shape == (batch, 1)
    assert jnp.allclose(qbf, q_ref, atol=5e-2, rtol=5e-2), "bf16 mismatch vs reference"

    print("KERNEL_OK")
</pallas_src>

<mosaic_0001>
module attributes {stable_mosaic.version = 11 : i64} {
  func.func @_qnet_kernel(%arg0: i32, %arg1: memref<128x17xf32, #tpu.memory_space<vmem>>, %arg2: memref<128x6xf32, #tpu.memory_space<vmem>>, %arg3: memref<256x256xf32, #tpu.memory_space<vmem>>, %arg4: memref<1x256xf32, #tpu.memory_space<vmem>>, %arg5: memref<256x256xf32, #tpu.memory_space<vmem>>, %arg6: memref<1x256xf32, #tpu.memory_space<vmem>>, %arg7: memref<1x256xf32, #tpu.memory_space<vmem>>, %arg8: memref<1xf32, #tpu.memory_space<smem>>, %arg9: memref<1x128xf32, #tpu.memory_space<vmem>>, %arg10: memref<128x256xf32, #tpu.memory_space<vmem>>) attributes {dimension_semantics = [#tpu.dimension_semantics<parallel>], iteration_bounds = array<i64: 1>, scalar_prefetch = 0 : i64, scratch_operands = 1 : i64, tpu.core_type = #tpu.core_type<tc>, window_params = [{transform_indices = @transform_0, window_bounds = array<i64: 128, 17>}, {transform_indices = @transform_1, window_bounds = array<i64: 128, 6>}, {pipeline_mode = #tpu.pipeline_mode<synchronous>, transform_indices = @transform_2, window_bounds = array<i64: 256, 256>}, {pipeline_mode = #tpu.pipeline_mode<synchronous>, transform_indices = @transform_3, window_bounds = array<i64: 1, 256>}, {pipeline_mode = #tpu.pipeline_mode<synchronous>, transform_indices = @transform_4, window_bounds = array<i64: 256, 256>}, {pipeline_mode = #tpu.pipeline_mode<synchronous>, transform_indices = @transform_5, window_bounds = array<i64: 1, 256>}, {pipeline_mode = #tpu.pipeline_mode<synchronous>, transform_indices = @transform_6, window_bounds = array<i64: 1, 256>}, {transform_indices = @transform_7, window_bounds = array<i64: 1>}, {transform_indices = @transform_8, window_bounds = array<i64: 1, 128>}]} {
    %cst = arith.constant 0.000000e+00 : f32
    %0 = vector.broadcast %cst : f32 to vector<128x256xf32>
    %c0 = arith.constant 0 : index
    %c0_0 = arith.constant 0 : index
    %1 = vector.load %arg10[%c0, %c0_0] : memref<128x256xf32, #tpu.memory_space<vmem>>, vector<128x256xf32>
    tpu.vector_store %arg10[%c0, %c0_0], %0 {strides = array<i32>} : memref<128x256xf32, #tpu.memory_space<vmem>>, vector<128x256xf32>,
    %c0_1 = arith.constant 0 : index
    %c0_2 = arith.constant 0 : index
    %2 = vector.load %arg1[%c0_1, %c0_2] : memref<128x17xf32, #tpu.memory_space<vmem>>, vector<128x17xf32>
    %c0_3 = arith.constant 0 : index
    %c0_4 = arith.constant 0 : index
    %3 = vector.load %arg10[%c0_3, %c0_4] : memref<128x256xf32, #tpu.memory_space<vmem>>, vector<128x17xf32>
    tpu.vector_store %arg10[%c0_3, %c0_4], %2 {strides = array<i32>} : memref<128x256xf32, #tpu.memory_space<vmem>>, vector<128x17xf32>,
    %c0_5 = arith.constant 0 : index
    %c0_6 = arith.constant 0 : index
    %4 = vector.load %arg2[%c0_5, %c0_6] : memref<128x6xf32, #tpu.memory_space<vmem>>, vector<128x6xf32>
    %c0_7 = arith.constant 0 : index
    %c128 = arith.constant 128 : index
    %5 = vector.load %arg10[%c0_7, %c128] : memref<128x256xf32, #tpu.memory_space<vmem>>, vector<128x6xf32>
    tpu.vector_store %arg10[%c0_7, %c128], %4 {strides = array<i32>} : memref<128x256xf32, #tpu.memory_space<vmem>>, vector<128x6xf32>,
    %c0_8 = arith.constant 0 : index
    %c0_9 = arith.constant 0 : index
    %6 = vector.load %arg10[%c0_8, %c0_9] : memref<128x256xf32, #tpu.memory_space<vmem>>, vector<128x256xf32>
    %c0_10 = arith.constant 0 : index
    %c0_11 = arith.constant 0 : index
    %7 = vector.load %arg3[%c0_10, %c0_11] : memref<256x256xf32, #tpu.memory_space<vmem>>, vector<256x256xf32>
    %cst_12 = arith.constant dense<0.000000e+00> : vector<128x256xf32>
    %8 = tpu.matmul %6, %7, %cst_12 {dimension_numbers = #tpu.dot_dimension_numbers<[1], [0], [0], [1], [0, 0, 1, 1], [], []>} : vector<128x256xf32>, vector<256x256xf32>, vector<128x256xf32> -> vector<128x256xf32>
    %c0_13 = arith.constant 0 : index
    %c0_14 = arith.constant 0 : index
    %9 = vector.load %arg4[%c0_13, %c0_14] : memref<1x256xf32, #tpu.memory_space<vmem>>, vector<1x256xf32>
    %10 = vector.broadcast %9 : vector<1x256xf32> to vector<128x256xf32>
    %11 = arith.addf %8, %10 : vector<128x256xf32>
    %cst_15 = arith.constant 0.000000e+00 : f32
    %12 = vector.broadcast %cst_15 : f32 to vector<128x256xf32>
    %13 = arith.maximumf %11, %12 : vector<128x256xf32>
    %c0_16 = arith.constant 0 : index
    %c0_17 = arith.constant 0 : index
    %14 = vector.load %arg5[%c0_16, %c0_17] : memref<256x256xf32, #tpu.memory_space<vmem>>, vector<256x256xf32>
    %cst_18 = arith.constant dense<0.000000e+00> : vector<128x256xf32>
    %15 = tpu.matmul %13, %14, %cst_18 {dimension_numbers = #tpu.dot_dimension_numbers<[1], [0], [0], [1], [0, 0, 1, 1], [], []>} : vector<128x256xf32>, vector<256x256xf32>, vector<128x256xf32> -> vector<128x256xf32>
    %c0_19 = arith.constant 0 : index
    %c0_20 = arith.constant 0 : index
    %16 = vector.load %arg6[%c0_19, %c0_20] : memref<1x256xf32, #tpu.memory_space<vmem>>, vector<1x256xf32>
    %17 = vector.broadcast %16 : vector<1x256xf32> to vector<128x256xf32>
    %18 = arith.addf %15, %17 : vector<128x256xf32>
    %cst_21 = arith.constant 0.000000e+00 : f32
    %19 = vector.broadcast %cst_21 : f32 to vector<128x256xf32>
    %20 = arith.maximumf %18, %19 : vector<128x256xf32>
    %c0_22 = arith.constant 0 : index
    %c0_23 = arith.constant 0 : index
    %21 = vector.load %arg7[%c0_22, %c0_23] : memref<1x256xf32, #tpu.memory_space<vmem>>, vector<1x256xf32>
    %22 = vector.broadcast %21 : vector<1x256xf32> to vector<128x256xf32>
    %23 = arith.mulf %20, %22 : vector<128x256xf32>
    %cst_24 = arith.constant dense<0.000000e+00> : vector<128xf32>
    %24 = vector.multi_reduction <add>, %23, %cst_24 [1] : vector<128x256xf32> to vector<128xf32>
    %c0_25 = arith.constant 0 : index
    %25 = memref.load %arg8[%c0_25] : memref<1xf32, #tpu.memory_space<smem>>
    %26 = vector.broadcast %25 : f32 to vector<128xf32>
    %27 = arith.addf %24, %26 : vector<128xf32>
    %28 = vector.shape_cast %27 : vector<128xf32> to vector<1x128xf32>
    %c0_26 = arith.constant 0 : index
    %c0_27 = arith.constant 0 : index
    %29 = vector.load %arg9[%c0_26, %c0_27] : memref<1x128xf32, #tpu.memory_space<vmem>>, vector<1x128xf32>
    tpu.vector_store %arg9[%c0_26, %c0_27], %28 {strides = array<i32>} : memref<1x128xf32, #tpu.memory_space<vmem>>, vector<1x128xf32>,
    return
  }
  func.func @transform_0(%arg0: i32) -> (i32, i32) {
    %c0_i32 = arith.constant 0 : i32
    %c0_i32_0 = arith.constant 0 : i32
    return %arg0, %c0_i32 : i32, i32
  }
  func.func @transform_1(%arg0: i32) -> (i32, i32) {
    %c0_i32 = arith.constant 0 : i32
    %c0_i32_0 = arith.constant 0 : i32
    return %arg0, %c0_i32 : i32, i32
  }
  func.func @transform_2(%arg0: i32) -> (i32, i32) {
    %c0_i32 = arith.constant 0 : i32
    %c0_i32_0 = arith.constant 0 : i32
    %c0_i32_1 = arith.constant 0 : i32
    return %c0_i32, %c0_i32_0 : i32, i32
  }
  func.func @transform_3(%arg0: i32) -> (i32, i32) {
    %c0_i32 = arith.constant 0 : i32
    %c0_i32_0 = arith.constant 0 : i32
    %c0_i32_1 = arith.constant 0 : i32
    return %c0_i32, %c0_i32_0 : i32, i32
  }
  func.func @transform_4(%arg0: i32) -> (i32, i32) {
    %c0_i32 = arith.constant 0 : i32
    %c0_i32_0 = arith.constant 0 : i32
    %c0_i32_1 = arith.constant 0 : i32
    return %c0_i32, %c0_i32_0 : i32, i32
  }
  func.func @transform_5(%arg0: i32) -> (i32, i32) {
    %c0_i32 = arith.constant 0 : i32
    %c0_i32_0 = arith.constant 0 : i32
    %c0_i32_1 = arith.constant 0 : i32
    return %c0_i32, %c0_i32_0 : i32, i32
  }
  func.func @transform_6(%arg0: i32) -> (i32, i32) {
    %c0_i32 = arith.constant 0 : i32
    %c0_i32_0 = arith.constant 0 : i32
    %c0_i32_1 = arith.constant 0 : i32
    return %c0_i32, %c0_i32_0 : i32, i32
  }
  func.func @transform_7(%arg0: i32) -> i32 {
    %c0_i32 = arith.constant 0 : i32
    %c0_i32_0 = arith.constant 0 : i32
    return %c0_i32 : i32
  }
  func.func @transform_8(%arg0: i32) -> (i32, i32) {
    %c0_i32 = arith.constant 0 : i32
    %c0_i32_0 = arith.constant 0 : i32
    return %arg0, %c0_i32 : i32, i32
  }
}

</mosaic_0001>

<llo_original>
// kernel: tpu_custom_call.1
$region0: #{tpu_custom_call.1}
  #allocation0 [shape = 'u32[]', space=smem, size = 0x4, offset = 0x4, fixed_abs, tag = 'smem constant byte address 0x4 - core index']
  #allocation1 [shape = 'u32[144,128]{1,0:T(1,128)}', space=vmem, size = 0x12000, scoped, tag = 'internal scratch']
  #allocation2 [shape = 'f32[128,256]{1,0:T(8,128)}', space=vmem, size = 0x20000, scoped, tag = 'scratch operand']
  #allocation3 [shape = 'f32[1]{0:T(128)S(6)}', space=smem, size = 0x200, scoped, tag = 'scoped memory for tpu_custom_call.1']
  %s0 = inlined_call_operand.hbm [shape: f32[8,17], index: 0, kind: input, shape index: {}]
  %s1 = inlined_call_operand.hbm [shape: f32[8,6], index: 1, kind: input, shape index: {}]
  %s2 = inlined_call_operand.hbm [shape: f32[256,256], index: 2, kind: input, shape index: {}]
  %s3 = inlined_call_operand.vmem [shape: f32[1,256], index: 3, kind: input, shape index: {}]
  %s4 = inlined_call_operand.hbm [shape: f32[256,256], index: 4, kind: input, shape index: {}]
  %s5 = inlined_call_operand.vmem [shape: f32[1,256], index: 5, kind: input, shape index: {}]
  %s6 = inlined_call_operand.vmem [shape: f32[1,256], index: 6, kind: input, shape index: {}]
  %s7 = inlined_call_operand.<no memory space> [shape: f32[1], index: 7, kind: input, shape index: {}]
  %s8 = inlined_call_operand.hbm [shape: f32[1,128], index: 8, kind: output, shape index: {}]
  %s9 = sld [smem:[#allocation0]]
  $region58: #{tpu_custom_call.1} parent=0
    _
  %s11 = ssub.s32 1, %s9
  %s12 = scalar_select 0, %s11, %s9
  %13 = sst [smem:[#allocation3]] %s7
  $region1: #{tpu_custom_call.1} parent=0
    #allocation4 [shape = 'u8[65536]{0}', space=vmem, size = 0x10000, scoped, tag = 'input window, operand 0, single buffered']
    #allocation5 [shape = 's32[1]{0}', space=sflag, size = 0x4, scoped, tag = 'scoped memory for tpu_custom_call.1']
    #allocation6 [shape = 's32[1]{0}', space=sflag, size = 0x4, scoped, tag = 'scoped memory for tpu_custom_call.1']
    #allocation7 [shape = 'u8[65536]{0}', space=vmem, size = 0x10000, scoped, tag = 'input window, operand 1, single buffered']
    #allocation8 [shape = 's32[1]{0}', space=sflag, size = 0x4, scoped, tag = 'scoped memory for tpu_custom_call.1']
    #allocation9 [shape = 'u8[262144]{0}', space=vmem, size = 0x40000, scoped, tag = 'input window, operand 2, single buffered']
    #allocation10 [shape = 'u8[262144]{0}', space=vmem, size = 0x40000, scoped, tag = 'input window, operand 4, single buffered']
    #allocation11 [shape = 's32[1]{0}', space=sflag, size = 0x4, scoped, tag = 'scoped memory for tpu_custom_call.1']
    #allocation12 [shape = 'u8[512]{0}', space=vmem, size = 0x400, scoped, tag = 'output window, operand 0, single buffered']
    %14 = vsyncpa [#allocation5], 0
    %15 = vsyncpa [#allocation8], 0
    %16 = vsyncpa [#allocation11], 0
    %17 = vsyncpa [#allocation6], 0
    // Predicated region
    $region2: #{tpu_custom_call.1} parent=1 // pred_check
      _
    $region3: #{tpu_custom_call.1} parent=1 // pred_check_branch
      %19 = sbr.rel (0) target = $region5
    $region4: #{tpu_custom_call.1} parent=1 // pred_region
      %s21 = ssub.s32 2048, 128
      %22 = vsyncadd [#allocation5], %s21
      %s23 = sshll.u32 [#allocation4], 4
      %s24 = int_to_ptr.vmem [resolvable:$true] %s23
      %29 = dma.hbm_to_vmem [thread:$0]  %s0, 128, %s24, [#allocation5], 128, 128, 8
    $region5: #{tpu_custom_call.1} parent=1 // pred_fallthru
      _
    // Predicated region
    $region6: #{tpu_custom_call.1} parent=1 // pred_check
      _
    $region7: #{tpu_custom_call.1} parent=1 // pred_check_branch
      %31 = sbr.rel (0) target = $region9
    $region8: #{tpu_custom_call.1} parent=1 // pred_region
      %s33 = ssub.s32 2048, 128
      %34 = vsyncadd [#allocation8], %s33
      %s35 = sshll.u32 [#allocation7], 4
      %s36 = int_to_ptr.vmem [resolvable:$true] %s35
      %41 = dma.hbm_to_vmem [thread:$0]  %s1, 128, %s36, [#allocation8], 128, 128, 8
    $region9: #{tpu_custom_call.1} parent=1 // pred_fallthru
      _
    // Predicated region
    $region10: #{tpu_custom_call.1} parent=1 // pred_check
      _
    $region11: #{tpu_custom_call.1} parent=1 // pred_check_branch
      %43 = sbr.rel (0) target = $region13
    $region12: #{tpu_custom_call.1} parent=1 // pred_region
      %s45 = ssub.s32 8192, 8192
      %46 = vsyncadd [#allocation8], %s45
      %s47 = sshll.u32 [#allocation9], 4
      %s48 = int_to_ptr.vmem [resolvable:$true] %s47
      %53 = dma.hbm_to_vmem [thread:$0]  %s2, 8192, %s48, [#allocation8], 256, 256, 16
    $region13: #{tpu_custom_call.1} parent=1 // pred_fallthru
      _
    // Predicated region
    $region14: #{tpu_custom_call.1} parent=1 // pred_check
      _
    $region15: #{tpu_custom_call.1} parent=1 // pred_check_branch
      %55 = sbr.rel (0) target = $region17
    $region16: #{tpu_custom_call.1} parent=1 // pred_region
      _
    $region17: #{tpu_custom_call.1} parent=1 // pred_fallthru
      _
    // Predicated region
    $region18: #{tpu_custom_call.1} parent=1 // pred_check
      _
    $region19: #{tpu_custom_call.1} parent=1 // pred_check_branch
      %57 = sbr.rel (0) target = $region21
    $region20: #{tpu_custom_call.1} parent=1 // pred_region
      %s59 = ssub.s32 8192, 8192
      %60 = vsyncadd [#allocation11], %s59
      %s61 = sshll.u32 [#allocation10], 4
      %s62 = int_to_ptr.vmem [resolvable:$true] %s61
      %67 = dma.hbm_to_vmem [thread:$0]  %s4, 8192, %s62, [#allocation11], 256, 256, 16
    $region21: #{tpu_custom_call.1} parent=1 // pred_fallthru
      _
    // Predicated region
    $region22: #{tpu_custom_call.1} parent=1 // pred_check
      _
    $region23: #{tpu_custom_call.1} parent=1 // pred_check_branch
      %69 = sbr.rel (0) target = $region25
    $region24: #{tpu_custom_call.1} parent=1 // pred_region
      _
    $region25: #{tpu_custom_call.1} parent=1 // pred_fallthru
      _
    // Predicated region
    $region26: #{tpu_custom_call.1} parent=1 // pred_check
      _
    $region27: #{tpu_custom_call.1} parent=1 // pred_check_branch
      %71 = sbr.rel (0) target = $region29
    $region28: #{tpu_custom_call.1} parent=1 // pred_region
      _
    $region29: #{tpu_custom_call.1} parent=1 // pred_fallthru
      _
    // Predicated region
    $region30: #{tpu_custom_call.1} parent=1 // pred_check
      _
    $region31: #{tpu_custom_call.1} parent=1 // pred_check_branch
      %73 = sbr.rel (0) target = $region33
    $region32: #{tpu_custom_call.1} parent=1 // pred_region
      _
    $region33: #{tpu_custom_call.1} parent=1 // pred_fallthru
      _
    // Predicated region
    $region34: #{tpu_custom_call.1} parent=1 // pred_check
      _
    $region35: #{tpu_custom_call.1} parent=1 // pred_check_branch
      %75 = sbr.rel (0) target = $region37
    $region36: #{tpu_custom_call.1} parent=1 // pred_region
      %76 = dma.done [#allocation5], 2048
    $region37: #{tpu_custom_call.1} parent=1 // pred_fallthru
      _
    // Predicated region
    $region38: #{tpu_custom_call.1} parent=1 // pred_check
      _
    $region39: #{tpu_custom_call.1} parent=1 // pred_check_branch
      %78 = sbr.rel (0) target = $region41
    $region40: #{tpu_custom_call.1} parent=1 // pred_region
      %79 = dma.done [#allocation8], 2048
    $region41: #{tpu_custom_call.1} parent=1 // pred_fallthru
      _
    // Predicated region
    $region42: #{tpu_custom_call.1} parent=1 // pred_check
      _
    $region43: #{tpu_custom_call.1} parent=1 // pred_check_branch
      %81 = sbr.rel (0) target = $region45
    $region44: #{tpu_custom_call.1} parent=1 // pred_region
      %82 = dma.done [#allocation8], 8192
    $region45: #{tpu_custom_call.1} parent=1 // pred_fallthru
      _
    // Predicated region
    $region46: #{tpu_custom_call.1} parent=1 // pred_check
      _
    $region47: #{tpu_custom_call.1} parent=1 // pred_check_branch
      %84 = sbr.rel (0) target = $region49
    $region48: #{tpu_custom_call.1} parent=1 // pred_region
      %85 = dma.done [#allocation11], 8192
    $region49: #{tpu_custom_call.1} parent=1 // pred_fallthru
      _
    %86 = vst [vmem:[#allocation2] sm:$0xff] 0.0
    %87 = vst [vmem:[#allocation2 + $0x8] sm:$0xff] 0.0
    %88 = vst [vmem:[#allocation2 + $0x10] sm:$0xff] 0.0
    %89 = vst [vmem:[#allocation2 + $0x18] sm:$0xff] 0.0
    %90 = vst [vmem:[#allocation2 + $0x20] sm:$0xff] 0.0
    %91 = vst [vmem:[#allocation2 + $0x28] sm:$0xff] 0.0
    %92 = vst [vmem:[#allocation2 + $0x30] sm:$0xff] 0.0
    %93 = vst [vmem:[#allocation2 + $0x38] sm:$0xff] 0.0
    %94 = vst [vmem:[#allocation2 + $0x40] sm:$0xff] 0.0
    %95 = vst [vmem:[#allocation2 + $0x48] sm:$0xff] 0.0
    %96 = vst [vmem:[#allocation2 + $0x50] sm:$0xff] 0.0
    %97 = vst [vmem:[#allocation2 + $0x58] sm:$0xff] 0.0
    %98 = vst [vmem:[#allocation2 + $0x60] sm:$0xff] 0.0
    %99 = vst [vmem:[#allocation2 + $0x68] sm:$0xff] 0.0
    %100 = vst [vmem:[#allocation2 + $0x70] sm:$0xff] 0.0
    %101 = vst [vmem:[#allocation2 + $0x78] sm:$0xff] 0.0
    %102 = vst [vmem:[#allocation2 + $0x80] sm:$0xff] 0.0
    %103 = vst [vmem:[#allocation2 + $0x88] sm:$0xff] 0.0
    %104 = vst [vmem:[#allocation2 + $0x90] sm:$0xff] 0.0
    %105 = vst [vmem:[#allocation2 + $0x98] sm:$0xff] 0.0
    %106 = vst [vmem:[#allocation2 + $0xa0] sm:$0xff] 0.0
    %107 = vst [vmem:[#allocation2 + $0xa8] sm:$0xff] 0.0
    %108 = vst [vmem:[#allocation2 + $0xb0] sm:$0xff] 0.0
    %109 = vst [vmem:[#allocation2 + $0xb8] sm:$0xff] 0.0
    %110 = vst [vmem:[#allocation2 + $0xc0] sm:$0xff] 0.0
    %111 = vst [vmem:[#allocation2 + $0xc8] sm:$0xff] 0.0
    %112 = vst [vmem:[#allocation2 + $0xd0] sm:$0xff] 0.0
    %113 = vst [vmem:[#allocation2 + $0xd8] sm:$0xff] 0.0
    %114 = vst [vmem:[#allocation2 + $0xe0] sm:$0xff] 0.0
    %115 = vst [vmem:[#allocation2 + $0xe8] sm:$0xff] 0.0
    %116 = vst [vmem:[#allocation2 + $0xf0] sm:$0xff] 0.0
    %117 = vst [vmem:[#allocation2 + $0xf8] sm:$0xff] 0.0
    %v118 = vld [vmem:[#allocation4] sm:$0xff]
    %v119 = vld [vmem:[#allocation4 + $0x8] sm:$0xff]
    %v120 = vld [vmem:[#allocation4 + $0x10] sm:$0xff]
    %v121 = vld [vmem:[#allocation4 + $0x18] sm:$0xff]
    %v122 = vld [vmem:[#allocation4 + $0x20] sm:$0xff]
    %v123 = vld [vmem:[#allocation4 + $0x28] sm:$0xff]
    %v124 = vld [vmem:[#allocation4 + $0x30] sm:$0xff]
    %v125 = vld [vmem:[#allocation4 + $0x38] sm:$0xff]
    %v126 = vld [vmem:[#allocation4 + $0x40] sm:$0xff]
    %v127 = vld [vmem:[#allocation4 + $0x48] sm:$0xff]
    %v128 = vld [vmem:[#allocation4 + $0x50] sm:$0xff]
    %v129 = vld [vmem:[#allocation4 + $0x58] sm:$0xff]
    %v130 = vld [vmem:[#allocation4 + $0x60] sm:$0xff]
    %v131 = vld [vmem:[#allocation4 + $0x68] sm:$0xff]
    %v132 = vld [vmem:[#allocation4 + $0x70] sm:$0xff]
    %v133 = vld [vmem:[#allocation4 + $0x78] sm:$0xff]
    %vm134 = vcmask 138240
    %135 = vst.msk [vmem:[#allocation2] sm:$0xff] %vm134, %v118
    %136 = vst.msk [vmem:[#allocation2 + $0x10] sm:$0xff] %vm134, %v119
    %137 = vst.msk [vmem:[#allocation2 + $0x20] sm:$0xff] %vm134, %v120
    %138 = vst.msk [vmem:[#allocation2 + $0x30] sm:$0xff] %vm134, %v121
    %139 = vst.msk [vmem:[#allocation2 + $0x40] sm:$0xff] %vm134, %v122
    %140 = vst.msk [vmem:[#allocation2 + $0x50] sm:$0xff] %vm134, %v123
    %141 = vst.msk [vmem:[#allocation2 + $0x60] sm:$0xff] %vm134, %v124
    %142 = vst.msk [vmem:[#allocation2 + $0x70] sm:$0xff] %vm134, %v125
    %143 = vst.msk [vmem:[#allocation2 + $0x80] sm:$0xff] %vm134, %v126
    %144 = vst.msk [vmem:[#allocation2 + $0x90] sm:$0xff] %vm134, %v127
    %145 = vst.msk [vmem:[#allocation2 + $0xa0] sm:$0xff] %vm134, %v128
    %146 = vst.msk [vmem:[#allocation2 + $0xb0] sm:$0xff] %vm134, %v129
    %147 = vst.msk [vmem:[#allocation2 + $0xc0] sm:$0xff] %vm134, %v130
    %148 = vst.msk [vmem:[#allocation2 + $0xd0] sm:$0xff] %vm134, %v131
    %149 = vst.msk [vmem:[#allocation2 + $0xe0] sm:$0xff] %vm134, %v132
    %150 = vst.msk [vmem:[#allocation2 + $0xf0] sm:$0xff] %vm134, %v133
    %v151 = vld [vmem:[#allocation7] sm:$0xff]
    %v152 = vld [vmem:[#allocation7 + $0x8] sm:$0xff]
    %v153 = vld [vmem:[#allocation7 + $0x10] sm:$0xff]
    %v154 = vld [vmem:[#allocation7 + $0x18] sm:$0xff]
    %v155 = vld [vmem:[#allocation7 + $0x20] sm:$0xff]
    %v156 = vld [vmem:[#allocation7 + $0x28] sm:$0xff]
    %v157 = vld [vmem:[#allocation7 + $0x30] sm:$0xff]
    %v158 = vld [vmem:[#allocation7 + $0x38] sm:$0xff]
    %v159 = vld [vmem:[#allocation7 + $0x40] sm:$0xff]
    %v160 = vld [vmem:[#allocation7 + $0x48] sm:$0xff]
    %v161 = vld [vmem:[#allocation7 + $0x50] sm:$0xff]
    %v162 = vld [vmem:[#allocation7 + $0x58] sm:$0xff]
    %v163 = vld [vmem:[#allocation7 + $0x60] sm:$0xff]
    %v164 = vld [vmem:[#allocation7 + $0x68] sm:$0xff]
    %v165 = vld [vmem:[#allocation7 + $0x70] sm:$0xff]
    %v166 = vld [vmem:[#allocation7 + $0x78] sm:$0xff]
    %vm167 = vcmask 48128
    %168 = vst.msk [vmem:[#allocation2 + $0x8] sm:$0xff] %vm167, %v151
    %169 = vst.msk [vmem:[#allocation2 + $0x18] sm:$0xff] %vm167, %v152
    %170 = vst.msk [vmem:[#allocation2 + $0x28] sm:$0xff] %vm167, %v153
    %171 = vst.msk [vmem:[#allocation2 + $0x38] sm:$0xff] %vm167, %v154
    %172 = vst.msk [vmem:[#allocation2 + $0x48] sm:$0xff] %vm167, %v155
    %173 = vst.msk [vmem:[#allocation2 + $0x58] sm:$0xff] %vm167, %v156
    %174 = vst.msk [vmem:[#allocation2 + $0x68] sm:$0xff] %vm167, %v157
    %175 = vst.msk [vmem:[#allocation2 + $0x78] sm:$0xff] %vm167, %v158
    %176 = vst.msk [vmem:[#allocation2 + $0x88] sm:$0xff] %vm167, %v159
    %177 = vst.msk [vmem:[#allocation2 + $0x98] sm:$0xff] %vm167, %v160
    %178 = vst.msk [vmem:[#allocation2 + $0xa8] sm:$0xff] %vm167, %v161
    %179 = vst.msk [vmem:[#allocation2 + $0xb8] sm:$0xff] %vm167, %v162
    %180 = vst.msk [vmem:[#allocation2 + $0xc8] sm:$0xff] %vm167, %v163
    %181 = vst.msk [vmem:[#allocation2 + $0xd8] sm:$0xff] %vm167, %v164
    %182 = vst.msk [vmem:[#allocation2 + $0xe8] sm:$0xff] %vm167, %v165
    %183 = vst.msk [vmem:[#allocation2 + $0xf8] sm:$0xff] %vm167, %v166
    %v184 = vld [vmem:[#allocation2] sm:$0xff]
    %v185 = vld [vmem:[#allocation2 + $0x8] sm:$0xff]
    %v186 = vld [vmem:[#allocation2 + $0x10] sm:$0xff]
    %v187 = vld [vmem:[#allocation2 + $0x18] sm:$0xff]
    %v188 = vld [vmem:[#allocation2 + $0x20] sm:$0xff]
    %v189 = vld [vmem:[#allocation2 + $0x28] sm:$0xff]
    %v190 = vld [vmem:[#allocation2 + $0x30] sm:$0xff]
    %v191 = vld [vmem:[#allocation2 + $0x38] sm:$0xff]
    %v192 = vld [vmem:[#allocation2 + $0x40] sm:$0xff]
    %v193 = vld [vmem:[#allocation2 + $0x48] sm:$0xff]
    %v194 = vld [vmem:[#allocation2 + $0x50] sm:$0xff]
    %v195 = vld [vmem:[#allocation2 + $0x58] sm:$0xff]
    %v196 = vld [vmem:[#allocation2 + $0x60] sm:$0xff]
    %v197 = vld [vmem:[#allocation2 + $0x68] sm:$0xff]
    %v198 = vld [vmem:[#allocation2 + $0x70] sm:$0xff]
    %v199 = vld [vmem:[#allocation2 + $0x78] sm:$0xff]
    %v200 = vld [vmem:[#allocation2 + $0x80] sm:$0xff]
    %v201 = vld [vmem:[#allocation2 + $0x88] sm:$0xff]
    %v202 = vld [vmem:[#allocation2 + $0x90] sm:$0xff]
    %v203 = vld [vmem:[#allocation2 + $0x98] sm:$0xff]
    %v204 = vld [vmem:[#allocation2 + $0xa0] sm:$0xff]
    %v205 = vld [vmem:[#allocation2 + $0xa8] sm:$0xff]
    %v206 = vld [vmem:[#allocation2 + $0xb0] sm:$0xff]
    %v207 = vld [vmem:[#allocation2 + $0xb8] sm:$0xff]
    %v208 = vld [vmem:[#allocation2 + $0xc0] sm:$0xff]
    %v209 = vld [vmem:[#allocation2 + $0xc8] sm:$0xff]
    %v210 = vld [vmem:[#allocation2 + $0xd0] sm:$0xff]
    %v211 = vld [vmem:[#allocation2 + $0xd8] sm:$0xff]
    %v212 = vld [vmem:[#allocation2 + $0xe0] sm:$0xff]
    %v213 = vld [vmem:[#allocation2 + $0xe8] sm:$0xff]
    %v214 = vld [vmem:[#allocation2 + $0xf0] sm:$0xff]
    %v215 = vld [vmem:[#allocation2 + $0xf8] sm:$0xff]
    %v216 = vld [vmem:[#allocation9] sm:$0xff]
    %v217 = vld [vmem:[#allocation9 + $0x8] sm:$0xff]
    %v218 = vld [vmem:[#allocation9 + $0x10] sm:$0xff]
    %v219 = vld [vmem:[#allocation9 + $0x18] sm:$0xff]
    %v220 = vld [vmem:[#allocation9 + $0x20] sm:$0xff]
    %v221 = vld [vmem:[#allocation9 + $0x28] sm:$0xff]
    %v222 = vld [vmem:[#allocation9 + $0x30] sm:$0xff]
    %v223 = vld [vmem:[#allocation9 + $0x38] sm:$0xff]
    %v224 = vld [vmem:[#allocation9 + $0x40] sm:$0xff]
    %v225 = vld [vmem:[#allocation9 + $0x48] sm:$0xff]
    %v226 = vld [vmem:[#allocation9 + $0x50] sm:$0xff]
    %v227 = vld [vmem:[#allocation9 + $0x58] sm:$0xff]
    %v228 = vld [vmem:[#allocation9 + $0x60] sm:$0xff]
    %v229 = vld [vmem:[#allocation9 + $0x68] sm:$0xff]
    %v230 = vld [vmem:[#allocation9 + $0x70] sm:$0xff]
    %v231 = vld [vmem:[#allocation9 + $0x78] sm:$0xff]
    %v232 = vld [vmem:[#allocation9 + $0x80] sm:$0xff]
    %v233 = vld [vmem:[#allocation9 + $0x88] sm:$0xff]
    %v234 = vld [vmem:[#allocation9 + $0x90] sm:$0xff]
    %v235 = vld [vmem:[#allocation9 + $0x98] sm:$0xff]
    %v236 = vld [vmem:[#allocation9 + $0xa0] sm:$0xff]
    %v237 = vld [vmem:[#allocation9 + $0xa8] sm:$0xff]
    %v238 = vld [vmem:[#allocation9 + $0xb0] sm:$0xff]
    %v239 = vld [vmem:[#allocation9 + $0xb8] sm:$0xff]
    %v240 = vld [vmem:[#allocation9 + $0xc0] sm:$0xff]
    %v241 = vld [vmem:[#allocation9 + $0xc8] sm:$0xff]
    %v242 = vld [vmem:[#allocation9 + $0xd0] sm:$0xff]
    %v243 = vld [vmem:[#allocation9 + $0xd8] sm:$0xff]
    %v244 = vld [vmem:[#allocation9 + $0xe0] sm:$0xff]
    %v245 = vld [vmem:[#allocation9 + $0xe8] sm:$0xff]
    %v246 = vld [vmem:[#allocation9 + $0xf0] sm:$0xff]
    %v247 = vld [vmem:[#allocation9 + $0xf8] sm:$0xff]
    %v248 = vld [vmem:[#allocation9 + $0x100] sm:$0xff]
    %v249 = vld [vmem:[#allocation9 + $0x108] sm:$0xff]
    %v250 = vld [vmem:[#allocation9 + $0x110] sm:$0xff]
    %v251 = vld [vmem:[#allocation9 + $0x118] sm:$0xff]
    %v252 = vld [vmem:[#allocation9 + $0x120] sm:$0xff]
    %v253 = vld [vmem:[#allocation9 + $0x128] sm:$0xff]
    %v254 = vld [vmem:[#allocation9 + $0x130] sm:$0xff]
    %v255 = vld [vmem:[#allocation9 + $0x138] sm:$0xff]
    %v256 = vld [vmem:[#allocation9 + $0x140] sm:$0xff]
    %v257 = vld [vmem:[#allocation9 + $0x148] sm:$0xff]
    %v258 = vld [vmem:[#allocation9 + $0x150] sm:$0xff]
    %v259 = vld [vmem:[#allocation9 + $0x158] sm:$0xff]
    %v260 = vld [vmem:[#allocation9 + $0x160] sm:$0xff]
    %v261 = vld [vmem:[#allocation9 + $0x168] sm:$0xff]
    %v262 = vld [vmem:[#allocation9 + $0x170] sm:$0xff]
    %v263 = vld [vmem:[#allocation9 + $0x178] sm:$0xff]
    %v264 = vld [vmem:[#allocation9 + $0x180] sm:$0xff]
    %v265 = vld [vmem:[#allocation9 + $0x188] sm:$0xff]
    %v266 = vld [vmem:[#allocation9 + $0x190] sm:$0xff]
    %v267 = vld [vmem:[#allocation9 + $0x198] sm:$0xff]
    %v268 = vld [vmem:[#allocation9 + $0x1a0] sm:$0xff]
    %v269 = vld [vmem:[#allocation9 + $0x1a8] sm:$0xff]
    %v270 = vld [vmem:[#allocation9 + $0x1b0] sm:$0xff]
    %v271 = vld [vmem:[#allocation9 + $0x1b8] sm:$0xff]
    %v272 = vld [vmem:[#allocation9 + $0x1c0] sm:$0xff]
    %v273 = vld [vmem:[#allocation9 + $0x1c8] sm:$0xff]
    %v274 = vld [vmem:[#allocation9 + $0x1d0] sm:$0xff]
    %v275 = vld [vmem:[#allocation9 + $0x1d8] sm:$0xff]
    %v276 = vld [vmem:[#allocation9 + $0x1e0] sm:$0xff]
    %v277 = vld [vmem:[#allocation9 + $0x1e8] sm:$0xff]
    %v278 = vld [vmem:[#allocation9 + $0x1f0] sm:$0xff]
    %v279 = vld [vmem:[#allocation9 + $0x1f8] sm:$0xff]
    %v280 = vld [vmem:[%s3] sm:$0x3]
    %v282 = vlaneseq
    %v283 = vshrl.u32 %v282, 7
    %v284 = vsub.s32 0, %v283
    %v285 = vrot.slane %v280, %v284
    %v286 = vlaneseq
    %v287 = vshrl.u32 %v286, 7
    %v288 = vsub.s32 1, %v287
    %v289 = vrot.slane %v280, %v288
    %292 = vmatprep.subr.mxu0 %v217
    %293 = vmatpush1.msra.mxu0 %v216
    %294 = vmatprep.subr.mxu0 %v219
    %295 = vmatpush1.msra.mxu0 %v218
    %296 = vmatprep.subr.mxu0 %v221
    %297 = vmatpush1.msra.mxu0 %v220
    %298 = vmatprep.subr.mxu0 %v223
    %299 = vmatpush1.msra.mxu0 %v222
    %300 = vmatprep.subr.mxu0 %v225
    %301 = vmatpush1.msra.mxu0 %v224
    %302 = vmatprep.subr.mxu0 %v227
    %303 = vmatpush1.msra.mxu0 %v226
    %304 = vmatprep.subr.mxu0 %v229
    %305 = vmatpush1.msra.mxu0 %v228
    %306 = vmatprep.subr.mxu0 %v231
    %307 = vmatpush1.msra.mxu0 %v230
    %308 = vmatprep.subr.mxu0 %v233
    %309 = vmatpush1.msra.mxu0 %v232
    %310 = vmatprep.subr.mxu0 %v235
    %311 = vmatpush1.msra.mxu0 %v234
    %312 = vmatprep.subr.mxu0 %v237
    %313 = vmatpush1.msra.mxu0 %v236
    %314 = vmatprep.subr.mxu0 %v239
    %315 = vmatpush1.msra.mxu0 %v238
    %316 = vmatprep.subr.mxu0 %v241
    %317 = vmatpush1.msra.mxu0 %v240
    %318 = vmatprep.subr.mxu0 %v243
    %319 = vmatpush1.msra.mxu0 %v242
    %320 = vmatprep.subr.mxu0 %v245
    %321 = vmatpush1.msra.mxu0 %v244
    %322 = vmatprep.subr.mxu0 %v247
    %323 = vmatpush1.msra.mxu0 %v246
    %324 = vmatprep.subr.mxu0 %v249
    %325 = vmatpush1.msra.mxu0 %v248
    %326 = vmatprep.subr.mxu0 %v251
    %327 = vmatpush1.msra.mxu0 %v250
    %328 = vmatprep.subr.mxu0 %v253
    %329 = vmatpush1.msra.mxu0 %v252
    %330 = vmatprep.subr.mxu0 %v255
    %331 = vmatpush1.msra.mxu0 %v254
    %332 = vmatprep.subr.mxu0 %v257
    %333 = vmatpush1.msra.mxu0 %v256
    %334 = vmatprep.subr.mxu0 %v259
    %335 = vmatpush1.msra.mxu0 %v258
    %336 = vmatprep.subr.mxu0 %v261
    %337 = vmatpush1.msra.mxu0 %v260
    %338 = vmatprep.subr.mxu0 %v263
    %339 = vmatpush1.msra.mxu0 %v262
    %340 = vmatprep.subr.mxu0 %v265
    %341 = vmatpush1.msra.mxu0 %v264
    %342 = vmatprep.subr.mxu0 %v267
    %343 = vmatpush1.msra.mxu0 %v266
    %344 = vmatprep.subr.mxu0 %v269
    %345 = vmatpush1.msra.mxu0 %v268
    %346 = vmatprep.subr.mxu0 %v271
    %347 = vmatpush1.msra.mxu0 %v270
    %348 = vmatprep.subr.mxu0 %v273
    %349 = vmatpush1.msra.mxu0 %v272
    %350 = vmatprep.subr.mxu0 %v275
    %351 = vmatpush1.msra.mxu0 %v274
    %352 = vmatprep.subr.mxu0 %v277
    %353 = vmatpush1.msra.mxu0 %v276
    %354 = vmatprep.subr.mxu0 %v279
    %355 = vmatpush1.msra.mxu0 %v278
    %356 = vmatprep.mubr.f32.mxu0 %v185
    %357 = vmatmul.mubr.f32.gmra.mrb[0].mxu0 %v184
    %v358 = vpop.f32.mrb[0].mxu0
    %v359 = vadd.f32 %v285, %v358
    %v360 = vpop.f32.mrb[0].mxu0
    %v361 = vadd.f32 %v289, %v360
    %362 = vmatprep.mubr.f32.mxu0 %v187
    %363 = vmatmul.mubr.f32.gmra.mrb[0].mxu0 %v186
    %v364 = vpop.f32.mrb[0].mxu0
    %v365 = vadd.f32 %v285, %v364
    %v366 = vpop.f32.mrb[0].mxu0
    %v367 = vadd.f32 %v289, %v366
    %368 = vmatprep.mubr.f32.mxu0 %v189
    %369 = vmatmul.mubr.f32.gmra.mrb[0].mxu0 %v188
    %v370 = vpop.f32.mrb[0].mxu0
    %v371 = vadd.f32 %v285, %v370
    %v372 = vpop.f32.mrb[0].mxu0
    %v373 = vadd.f32 %v289, %v372
    %374 = vmatprep.mubr.f32.mxu0 %v191
    %375 = vmatmul.mubr.f32.gmra.mrb[0].mxu0 %v190
    %v376 = vpop.f32.mrb[0].mxu0
    %v377 = vadd.f32 %v285, %v376
    %v378 = vpop.f32.mrb[0].mxu0
    %v379 = vadd.f32 %v289, %v378
    %380 = vmatprep.mubr.f32.mxu0 %v193
    %381 = vmatmul.mubr.f32.gmra.mrb[0].mxu0 %v192
    %v382 = vpop.f32.mrb[0].mxu0
    %v383 = vadd.f32 %v285, %v382
    %v384 = vpop.f32.mrb[0].mxu0
    %v385 = vadd.f32 %v289, %v384
    %386 = vmatprep.mubr.f32.mxu0 %v195
    %387 = vmatmul.mubr.f32.gmra.mrb[0].mxu0 %v194
    %v388 = vpop.f32.mrb[0].mxu0
    %v389 = vadd.f32 %v285, %v388
    %v390 = vpop.f32.mrb[0].mxu0
    %v391 = vadd.f32 %v289, %v390
    %392 = vmatprep.mubr.f32.mxu0 %v197
    %393 = vmatmul.mubr.f32.gmra.mrb[0].mxu0 %v196
    %v394 = vpop.f32.mrb[0].mxu0
    %v395 = vadd.f32 %v285, %v394
    %v396 = vpop.f32.mrb[0].mxu0
    %v397 = vadd.f32 %v289, %v396
    %398 = vmatprep.mubr.f32.mxu0 %v199
    %399 = vmatmul.mubr.f32.gmra.mrb[0].mxu0 %v198
    %v400 = vpop.f32.mrb[0].mxu0
    %v401 = vadd.f32 %v285, %v400
    %v402 = vpop.f32.mrb[0].mxu0
    %v403 = vadd.f32 %v289, %v402
    %404 = vmatprep.mubr.f32.mxu0 %v201
    %405 = vmatmul.mubr.f32.gmra.mrb[0].mxu0 %v200
    %v406 = vpop.f32.mrb[0].mxu0
    %v407 = vadd.f32 %v285, %v406
    %v408 = vpop.f32.mrb[0].mxu0
    %v409 = vadd.f32 %v289, %v408
    %410 = vmatprep.mubr.f32.mxu0 %v203
    %411 = vmatmul.mubr.f32.gmra.mrb[0].mxu0 %v202
    %v412 = vpop.f32.mrb[0].mxu0
    %v413 = vadd.f32 %v285, %v412
    %v414 = vpop.f32.mrb[0].mxu0
    %v415 = vadd.f32 %v289, %v414
    %416 = vmatprep.mubr.f32.mxu0 %v205
    %417 = vmatmul.mubr.f32.gmra.mrb[0].mxu0 %v204
    %v418 = vpop.f32.mrb[0].mxu0
    %v419 = vadd.f32 %v285, %v418
    %v420 = vpop.f32.mrb[0].mxu0
    %v421 = vadd.f32 %v289, %v420
    %422 = vmatprep.mubr.f32.mxu0 %v207
    %423 = vmatmul.mubr.f32.gmra.mrb[0].mxu0 %v206
    %v424 = vpop.f32.mrb[0].mxu0
    %v425 = vadd.f32 %v285, %v424
    %v426 = vpop.f32.mrb[0].mxu0
    %v427 = vadd.f32 %v289, %v426
    %428 = vmatprep.mubr.f32.mxu0 %v209
    %429 = vmatmul.mubr.f32.gmra.mrb[0].mxu0 %v208
    %v430 = vpop.f32.mrb[0].mxu0
    %v431 = vadd.f32 %v285, %v430
    %v432 = vpop.f32.mrb[0].mxu0
    %v433 = vadd.f32 %v289, %v432
    %434 = vmatprep.mubr.f32.mxu0 %v211
    %435 = vmatmul.mubr.f32.gmra.mrb[0].mxu0 %v210
    %v436 = vpop.f32.mrb[0].mxu0
    %v437 = vadd.f32 %v285, %v436
    %v438 = vpop.f32.mrb[0].mxu0
    %v439 = vadd.f32 %v289, %v438
    %440 = vmatprep.mubr.f32.mxu0 %v213
    %441 = vmatmul.mubr.f32.gmra.mrb[0].mxu0 %v212
    %v442 = vpop.f32.mrb[0].mxu0
    %v443 = vadd.f32 %v285, %v442
    %v444 = vpop.f32.mrb[0].mxu0
    %v445 = vadd.f32 %v289, %v444
    %446 = vmatprep.mubr.f32.mxu0 %v215
    %447 = vmatmul.mubr.f32.gmra.mrb[0].mxu0 %v214
    %v448 = vpop.f32.mrb[0].mxu0
    %v449 = vadd.f32 %v285, %v448
    %v450 = vpop.f32.mrb[0].mxu0
    %v451 = vadd.f32 %v289, %v450
    %452 = vdwg.mxu0
    %v453 = vmax.f32 %v359, 0.0
    %v454 = vmax.f32 %v361, 0.0
    %v455 = vmax.f32 %v365, 0.0
    %v456 = vmax.f32 %v367, 0.0
    %v457 = vmax.f32 %v371, 0.0
    %v458 = vmax.f32 %v373, 0.0
    %v459 = vmax.f32 %v377, 0.0
    %v460 = vmax.f32 %v379, 0.0
    %v461 = vmax.f32 %v383, 0.0
    %v462 = vmax.f32 %v385, 0.0
    %v463 = vmax.f32 %v389, 0.0
    %v464 = vmax.f32 %v391, 0.0
    %v465 = vmax.f32 %v395, 0.0
    %v466 = vmax.f32 %v397, 0.0
    %v467 = vmax.f32 %v401, 0.0
    %v468 = vmax.f32 %v403, 0.0
    %v469 = vmax.f32 %v407, 0.0
    %v470 = vmax.f32 %v409, 0.0
    %v471 = vmax.f32 %v413, 0.0
    %v472 = vmax.f32 %v415, 0.0
    %v473 = vmax.f32 %v419, 0.0
    %v474 = vmax.f32 %v421, 0.0
    %v475 = vmax.f32 %v425, 0.0
    %v476 = vmax.f32 %v427, 0.0
    %v477 = vmax.f32 %v431, 0.0
    %v478 = vmax.f32 %v433, 0.0
    %v479 = vmax.f32 %v437, 0.0
    %v480 = vmax.f32 %v439, 0.0
    %v481 = vmax.f32 %v443, 0.0
    %v482 = vmax.f32 %v445, 0.0
    %v483 = vmax.f32 %v449, 0.0
    %v484 = vmax.f32 %v451, 0.0
    %v485 = vld [vmem:[#allocation10] sm:$0xff]
    %v486 = vld [vmem:[#allocation10 + $0x8] sm:$0xff]
    %v487 = vld [vmem:[#allocation10 + $0x10] sm:$0xff]
    %v488 = vld [vmem:[#allocation10 + $0x18] sm:$0xff]
    %v489 = vld [vmem:[#allocation10 + $0x20] sm:$0xff]
    %v490 = vld [vmem:[#allocation10 + $0x28] sm:$0xff]
    %v491 = vld [vmem:[#allocation10 + $0x30] sm:$0xff]
    %v492 = vld [vmem:[#allocation10 + $0x38] sm:$0xff]
    %v493 = vld [vmem:[#allocation10 + $0x40] sm:$0xff]
    %v494 = vld [vmem:[#allocation10 + $0x48] sm:$0xff]
    %v495 = vld [vmem:[#allocation10 + $0x50] sm:$0xff]
    %v496 = vld [vmem:[#allocation10 + $0x58] sm:$0xff]
    %v497 = vld [vmem:[#allocation10 + $0x60] sm:$0xff]
    %v498 = vld [vmem:[#allocation10 + $0x68] sm:$0xff]
    %v499 = vld [vmem:[#allocation10 + $0x70] sm:$0xff]
    %v500 = vld [vmem:[#allocation10 + $0x78] sm:$0xff]
    %v501 = vld [vmem:[#allocation10 + $0x80] sm:$0xff]
    %v502 = vld [vmem:[#allocation10 + $0x88] sm:$0xff]
    %v503 = vld [vmem:[#allocation10 + $0x90] sm:$0xff]
    %v504 = vld [vmem:[#allocation10 + $0x98] sm:$0xff]
    %v505 = vld [vmem:[#allocation10 + $0xa0] sm:$0xff]
    %v506 = vld [vmem:[#allocation10 + $0xa8] sm:$0xff]
    %v507 = vld [vmem:[#allocation10 + $0xb0] sm:$0xff]
    %v508 = vld [vmem:[#allocation10 + $0xb8] sm:$0xff]
    %v509 = vld [vmem:[#allocation10 + $0xc0] sm:$0xff]
    %v510 = vld [vmem:[#allocation10 + $0xc8] sm:$0xff]
    %v511 = vld [vmem:[#allocation10 + $0xd0] sm:$0xff]
    %v512 = vld [vmem:[#allocation10 + $0xd8] sm:$0xff]
    %v513 = vld [vmem:[#allocation10 + $0xe0] sm:$0xff]
    %v514 = vld [vmem:[#allocation10 + $0xe8] sm:$0xff]
    %v515 = vld [vmem:[#allocation10 + $0xf0] sm:$0xff]
    %v516 = vld [vmem:[#allocation10 + $0xf8] sm:$0xff]
    %v517 = vld [vmem:[#allocation10 + $0x100] sm:$0xff]
    %v518 = vld [vmem:[#allocation10 + $0x108] sm:$0xff]
    %v519 = vld [vmem:[#allocation10 + $0x110] sm:$0xff]
    %v520 = vld [vmem:[#allocation10 + $0x118] sm:$0xff]
    %v521 = vld [vmem:[#allocation10 + $0x120] sm:$0xff]
    %v522 = vld [vmem:[#allocation10 + $0x128] sm:$0xff]
    %v523 = vld [vmem:[#allocation10 + $0x130] sm:$0xff]
    %v524 = vld [vmem:[#allocation10 + $0x138] sm:$0xff]
    %v525 = vld [vmem:[#allocation10 + $0x140] sm:$0xff]
    %v526 = vld [vmem:[#allocation10 + $0x148] sm:$0xff]
    %v527 = vld [vmem:[#allocation10 + $0x150] sm:$0xff]
    %v528 = vld [vmem:[#allocation10 + $0x158] sm:$0xff]
    %v529 = vld [vmem:[#allocation10 + $0x160] sm:$0xff]
    %v530 = vld [vmem:[#allocation10 + $0x168] sm:$0xff]
    %v531 = vld [vmem:[#allocation10 + $0x170] sm:$0xff]
    %v532 = vld [vmem:[#allocation10 + $0x178] sm:$0xff]
    %v533 = vld [vmem:[#allocation10 + $0x180] sm:$0xff]
    %v534 = vld [vmem:[#allocation10 + $0x188] sm:$0xff]
    %v535 = vld [vmem:[#allocation10 + $0x190] sm:$0xff]
    %v536 = vld [vmem:[#allocation10 + $0x198] sm:$0xff]
    %v537 = vld [vmem:[#allocation10 + $0x1a0] sm:$0xff]
    %v538 = vld [vmem:[#allocation10 + $0x1a8] sm:$0xff]
    %v539 = vld [vmem:[#allocation10 + $0x1b0] sm:$0xff]
    %v540 = vld [vmem:[#allocation10 + $0x1b8] sm:$0xff]
    %v541 = vld [vmem:[#allocation10 + $0x1c0] sm:$0xff]
    %v542 = vld [vmem:[#allocation10 + $0x1c8] sm:$0xff]
    %v543 = vld [vmem:[#allocation10 + $0x1d0] sm:$0xff]
    %v544 = vld [vmem:[#allocation10 + $0x1d8] sm:$0xff]
    %v545 = vld [vmem:[#allocation10 + $0x1e0] sm:$0xff]
    %v546 = vld [vmem:[#allocation10 + $0x1e8] sm:$0xff]
    %v547 = vld [vmem:[#allocation10 + $0x1f0] sm:$0xff]
    %v548 = vld [vmem:[#allocation10 + $0x1f8] sm:$0xff]
    %v549 = vld [vmem:[%s5] sm:$0x3]
    %v551 = vlaneseq
    %v552 = vshrl.u32 %v551, 7
    %v553 = vsub.s32 0, %v552
    %v554 = vrot.slane %v549, %v553
    %v555 = vlaneseq
    %v556 = vshrl.u32 %v555, 7
    %v557 = vsub.s32 1, %v556
    %v558 = vrot.slane %v549, %v557
    %561 = vmatprep.subr.mxu0 %v486
    %562 = vmatpush1.msra.mxu0 %v485
    %563 = vmatprep.subr.mxu0 %v488
    %564 = vmatpush1.msra.mxu0 %v487
    %565 = vmatprep.subr.mxu0 %v490
    %566 = vmatpush1.msra.mxu0 %v489
    %567 = vmatprep.subr.mxu0 %v492
    %568 = vmatpush1.msra.mxu0 %v491
    %569 = vmatprep.subr.mxu0 %v494
    %570 = vmatpush1.msra.mxu0 %v493
    %571 = vmatprep.subr.mxu0 %v496
    %572 = vmatpush1.msra.mxu0 %v495
    %573 = vmatprep.subr.mxu0 %v498
    %574 = vmatpush1.msra.mxu0 %v497
    %575 = vmatprep.subr.mxu0 %v500
    %576 = vmatpush1.msra.mxu0 %v499
    %577 = vmatprep.subr.mxu0 %v502
    %578 = vmatpush1.msra.mxu0 %v501
    %579 = vmatprep.subr.mxu0 %v504
    %580 = vmatpush1.msra.mxu0 %v503
    %581 = vmatprep.subr.mxu0 %v506
    %582 = vmatpush1.msra.mxu0 %v505
    %583 = vmatprep.subr.mxu0 %v508
    %584 = vmatpush1.msra.mxu0 %v507
    %585 = vmatprep.subr.mxu0 %v510
    %586 = vmatpush1.msra.mxu0 %v509
    %587 = vmatprep.subr.mxu0 %v512
    %588 = vmatpush1.msra.mxu0 %v511
    %589 = vmatprep.subr.mxu0 %v514
    %590 = vmatpush1.msra.mxu0 %v513
    %591 = vmatprep.subr.mxu0 %v516
    %592 = vmatpush1.msra.mxu0 %v515
    %593 = vmatprep.subr.mxu0 %v518
    %594 = vmatpush1.msra.mxu0 %v517
    %595 = vmatprep.subr.mxu0 %v520
    %596 = vmatpush1.msra.mxu0 %v519
    %597 = vmatprep.subr.mxu0 %v522
    %598 = vmatpush1.msra.mxu0 %v521
    %599 = vmatprep.subr.mxu0 %v524
    %600 = vmatpush1.msra.mxu0 %v523
    %601 = vmatprep.subr.mxu0 %v526
    %602 = vmatpush1.msra.mxu0 %v525
    %603 = vmatprep.subr.mxu0 %v528
    %604 = vmatpush1.msra.mxu0 %v527
    %605 = vmatprep.subr.mxu0 %v530
    %606 = vmatpush1.msra.mxu0 %v529
    %607 = vmatprep.subr.mxu0 %v532
    %608 = vmatpush1.msra.mxu0 %v531
    %609 = vmatprep.subr.mxu0 %v534
    %610 = vmatpush1.msra.mxu0 %v533
    %611 = vmatprep.subr.mxu0 %v536
    %612 = vmatpush1.msra.mxu0 %v535
    %613 = vmatprep.subr.mxu0 %v538
    %614 = vmatpush1.msra.mxu0 %v537
    %615 = vmatprep.subr.mxu0 %v540
    %616 = vmatpush1.msra.mxu0 %v539
    %617 = vmatprep.subr.mxu0 %v542
    %618 = vmatpush1.msra.mxu0 %v541
    %619 = vmatprep.subr.mxu0 %v544
    %620 = vmatpush1.msra.mxu0 %v543
    %621 = vmatprep.subr.mxu0 %v546
    %622 = vmatpush1.msra.mxu0 %v545
    %623 = vmatprep.subr.mxu0 %v548
    %624 = vmatpush1.msra.mxu0 %v547
    %625 = vmatprep.mubr.f32.mxu0 %v454
    %626 = vmatmul.mubr.f32.gmra.mrb[0].mxu0 %v453
    %v627 = vpop.f32.mrb[0].mxu0
    %v628 = vadd.f32 %v554, %v627
    %v629 = vpop.f32.mrb[0].mxu0
    %v630 = vadd.f32 %v558, %v629
    %631 = vmatprep.mubr.f32.mxu0 %v456
    %632 = vmatmul.mubr.f32.gmra.mrb[0].mxu0 %v455
    %v633 = vpop.f32.mrb[0].mxu0
    %v634 = vadd.f32 %v554, %v633
    %v635 = vpop.f32.mrb[0].mxu0
    %v636 = vadd.f32 %v558, %v635
    %637 = vmatprep.mubr.f32.mxu0 %v458
    %638 = vmatmul.mubr.f32.gmra.mrb[0].mxu0 %v457
    %v639 = vpop.f32.mrb[0].mxu0
    %v640 = vadd.f32 %v554, %v639
    %v641 = vpop.f32.mrb[0].mxu0
    %v642 = vadd.f32 %v558, %v641
    %643 = vmatprep.mubr.f32.mxu0 %v460
    %644 = vmatmul.mubr.f32.gmra.mrb[0].mxu0 %v459
    %v645 = vpop.f32.mrb[0].mxu0
    %v646 = vadd.f32 %v554, %v645
    %v647 = vpop.f32.mrb[0].mxu0
    %v648 = vadd.f32 %v558, %v647
    %649 = vmatprep.mubr.f32.mxu0 %v462
    %650 = vmatmul.mubr.f32.gmra.mrb[0].mxu0 %v461
    %v651 = vpop.f32.mrb[0].mxu0
    %v652 = vadd.f32 %v554, %v651
    %v653 = vpop.f32.mrb[0].mxu0
    %v654 = vadd.f32 %v558, %v653
    %655 = vmatprep.mubr.f32.mxu0 %v464
    %656 = vmatmul.mubr.f32.gmra.mrb[0].mxu0 %v463
    %v657 = vpop.f32.mrb[0].mxu0
    %v658 = vadd.f32 %v554, %v657
    %v659 = vpop.f32.mrb[0].mxu0
    %v660 = vadd.f32 %v558, %v659
    %661 = vmatprep.mubr.f32.mxu0 %v466
    %662 = vmatmul.mubr.f32.gmra.mrb[0].mxu0 %v465
    %v663 = vpop.f32.mrb[0].mxu0
    %v664 = vadd.f32 %v554, %v663
    %v665 = vpop.f32.mrb[0].mxu0
    %v666 = vadd.f32 %v558, %v665
    %667 = vmatprep.mubr.f32.mxu0 %v468
    %668 = vmatmul.mubr.f32.gmra.mrb[0].mxu0 %v467
    %v669 = vpop.f32.mrb[0].mxu0
    %v670 = vadd.f32 %v554, %v669
    %v671 = vpop.f32.mrb[0].mxu0
    %v672 = vadd.f32 %v558, %v671
    %673 = vmatprep.mubr.f32.mxu0 %v470
    %674 = vmatmul.mubr.f32.gmra.mrb[0].mxu0 %v469
    %v675 = vpop.f32.mrb[0].mxu0
    %v676 = vadd.f32 %v554, %v675
    %v677 = vpop.f32.mrb[0].mxu0
    %v678 = vadd.f32 %v558, %v677
    %679 = vmatprep.mubr.f32.mxu0 %v472
    %680 = vmatmul.mubr.f32.gmra.mrb[0].mxu0 %v471
    %v681 = vpop.f32.mrb[0].mxu0
    %v682 = vadd.f32 %v554, %v681
    %v683 = vpop.f32.mrb[0].mxu0
    %v684 = vadd.f32 %v558, %v683
    %685 = vmatprep.mubr.f32.mxu0 %v474
    %686 = vmatmul.mubr.f32.gmra.mrb[0].mxu0 %v473
    %v687 = vpop.f32.mrb[0].mxu0
    %v688 = vadd.f32 %v554, %v687
    %v689 = vpop.f32.mrb[0].mxu0
    %v690 = vadd.f32 %v558, %v689
    %691 = vmatprep.mubr.f32.mxu0 %v476
    %692 = vmatmul.mubr.f32.gmra.mrb[0].mxu0 %v475
    %v693 = vpop.f32.mrb[0].mxu0
    %v694 = vadd.f32 %v554, %v693
    %v695 = vpop.f32.mrb[0].mxu0
    %v696 = vadd.f32 %v558, %v695
    %697 = vmatprep.mubr.f32.mxu0 %v478
    %698 = vmatmul.mubr.f32.gmra.mrb[0].mxu0 %v477
    %v699 = vpop.f32.mrb[0].mxu0
    %v700 = vadd.f32 %v554, %v699
    %v701 = vpop.f32.mrb[0].mxu0
    %v702 = vadd.f32 %v558, %v701
    %703 = vmatprep.mubr.f32.mxu0 %v480
    %704 = vmatmul.mubr.f32.gmra.mrb[0].mxu0 %v479
    %v705 = vpop.f32.mrb[0].mxu0
    %v706 = vadd.f32 %v554, %v705
    %v707 = vpop.f32.mrb[0].mxu0
    %v708 = vadd.f32 %v558, %v707
    %709 = vmatprep.mubr.f32.mxu0 %v482
    %710 = vmatmul.mubr.f32.gmra.mrb[0].mxu0 %v481
    %v711 = vpop.f32.mrb[0].mxu0
    %v712 = vadd.f32 %v554, %v711
    %v713 = vpop.f32.mrb[0].mxu0
    %v714 = vadd.f32 %v558, %v713
    %715 = vmatprep.mubr.f32.mxu0 %v484
    %716 = vmatmul.mubr.f32.gmra.mrb[0].mxu0 %v483
    %v717 = vpop.f32.mrb[0].mxu0
    %v718 = vadd.f32 %v554, %v717
    %v719 = vpop.f32.mrb[0].mxu0
    %v720 = vadd.f32 %v558, %v719
    %721 = vdwg.mxu0
    %v722 = vmax.f32 %v628, 0.0
    %v723 = vmax.f32 %v630, 0.0
    %v724 = vmax.f32 %v634, 0.0
    %v725 = vmax.f32 %v636, 0.0
    %v726 = vmax.f32 %v640, 0.0
    %v727 = vmax.f32 %v642, 0.0
    %v728 = vmax.f32 %v646, 0.0
    %v729 = vmax.f32 %v648, 0.0
    %v730 = vmax.f32 %v652, 0.0
    %v731 = vmax.f32 %v654, 0.0
    %v732 = vmax.f32 %v658, 0.0
    %v733 = vmax.f32 %v660, 0.0
    %v734 = vmax.f32 %v664, 0.0
    %v735 = vmax.f32 %v666, 0.0
    %v736 = vmax.f32 %v670, 0.0
    %v737 = vmax.f32 %v672, 0.0
    %v738 = vmax.f32 %v676, 0.0
    %v739 = vmax.f32 %v678, 0.0
    %v740 = vmax.f32 %v682, 0.0
    %v741 = vmax.f32 %v684, 0.0
    %v742 = vmax.f32 %v688, 0.0
    %v743 = vmax.f32 %v690, 0.0
    %v744 = vmax.f32 %v694, 0.0
    %v745 = vmax.f32 %v696, 0.0
    %v746 = vmax.f32 %v700, 0.0
    %v747 = vmax.f32 %v702, 0.0
    %v748 = vmax.f32 %v706, 0.0
    %v749 = vmax.f32 %v708, 0.0
    %v750 = vmax.f32 %v712, 0.0
    %v751 = vmax.f32 %v714, 0.0
    %v752 = vmax.f32 %v718, 0.0
    %v753 = vmax.f32 %v720, 0.0
    %v754 = vld [vmem:[%s6] sm:$0x3]
    %v756 = vlaneseq
    %v757 = vshrl.u32 %v756, 7
    %v758 = vsub.s32 0, %v757
    %v759 = vrot.slane %v754, %v758
    %v760 = vlaneseq
    %v761 = vshrl.u32 %v760, 7
    %v762 = vsub.s32 1, %v761
    %v763 = vrot.slane %v754, %v762
    %v766 = vmul.f32 %v722, %v759
    %v767 = vmul.f32 %v723, %v763
    %v768 = vmul.f32 %v724, %v759
    %v769 = vmul.f32 %v725, %v763
    %v770 = vmul.f32 %v726, %v759
    %v771 = vmul.f32 %v727, %v763
    %v772 = vmul.f32 %v728, %v759
    %v773 = vmul.f32 %v729, %v763
    %v774 = vmul.f32 %v730, %v759
    %v775 = vmul.f32 %v731, %v763
    %v776 = vmul.f32 %v732, %v759
    %v777 = vmul.f32 %v733, %v763
    %v778 = vmul.f32 %v734, %v759
    %v779 = vmul.f32 %v735, %v763
    %v780 = vmul.f32 %v736, %v759
    %v781 = vmul.f32 %v737, %v763
    %v782 = vmul.f32 %v738, %v759
    %v783 = vmul.f32 %v739, %v763
    %v784 = vmul.f32 %v740, %v759
    %v785 = vmul.f32 %v741, %v763
    %v786 = vmul.f32 %v742, %v759
    %v787 = vmul.f32 %v743, %v763
    %v788 = vmul.f32 %v744, %v759
    %v789 = vmul.f32 %v745, %v763
    %v790 = vmul.f32 %v746, %v759
    %v791 = vmul.f32 %v747, %v763
    %v792 = vmul.f32 %v748, %v759
    %v793 = vmul.f32 %v749, %v763
    %v794 = vmul.f32 %v750, %v759
    %v795 = vmul.f32 %v751, %v763
    %v796 = vmul.f32 %v752, %v759
    %v797 = vmul.f32 %v753, %v763
    %v798 = vadd.f32 %v766, %v767
    %799 = vadd.xlane.f32.xlu0 %v798
    %v800 = vpop.xlane.xlu0 %799
    %v801 = vadd.f32 %v768, %v769
    %802 = vadd.xlane.f32.xlu0 %v801
    %v803 = vpop.xlane.xlu0 %802
    %v804 = vadd.f32 %v770, %v771
    %805 = vadd.xlane.f32.xlu0 %v804
    %v806 = vpop.xlane.xlu0 %805
    %v807 = vadd.f32 %v772, %v773
    %808 = vadd.xlane.f32.xlu0 %v807
    %v809 = vpop.xlane.xlu0 %808
    %v810 = vadd.f32 %v774, %v775
    %811 = vadd.xlane.f32.xlu0 %v810
    %v812 = vpop.xlane.xlu0 %811
    %v813 = vadd.f32 %v776, %v777
    %814 = vadd.xlane.f32.xlu0 %v813
    %v815 = vpop.xlane.xlu0 %814
    %v816 = vadd.f32 %v778, %v779
    %817 = vadd.xlane.f32.xlu0 %v816
    %v818 = vpop.xlane.xlu0 %817
    %v819 = vadd.f32 %v780, %v781
    %820 = vadd.xlane.f32.xlu0 %v819
    %v821 = vpop.xlane.xlu0 %820
    %v822 = vadd.f32 %v782, %v783
    %823 = vadd.xlane.f32.xlu0 %v822
    %v824 = vpop.xlane.xlu0 %823
    %v825 = vadd.f32 %v784, %v785
    %826 = vadd.xlane.f32.xlu0 %v825
    %v827 = vpop.xlane.xlu0 %826
    %v828 = vadd.f32 %v786, %v787
    %829 = vadd.xlane.f32.xlu0 %v828
    %v830 = vpop.xlane.xlu0 %829
    %v831 = vadd.f32 %v788, %v789
    %832 = vadd.xlane.f32.xlu0 %v831
    %v833 = vpop.xlane.xlu0 %832
    %v834 = vadd.f32 %v790, %v791
    %835 = vadd.xlane.f32.xlu0 %v834
    %v836 = vpop.xlane.xlu0 %835
    %v837 = vadd.f32 %v792, %v793
    %838 = vadd.xlane.f32.xlu0 %v837
    %v839 = vpop.xlane.xlu0 %838
    %v840 = vadd.f32 %v794, %v795
    %841 = vadd.xlane.f32.xlu0 %v840
    %v842 = vpop.xlane.xlu0 %841
    %v843 = vadd.f32 %v796, %v797
    %844 = vadd.xlane.f32.xlu0 %v843
    %v845 = vpop.xlane.xlu0 %844
    %s846 = sld [smem:[#allocation3]]
    %v847 = vstv %s846
    %v848 = vadd.f32 %v800, %v847
    %v849 = vadd.f32 %v803, %v847
    %v850 = vadd.f32 %v806, %v847
    %v851 = vadd.f32 %v809, %v847
    %v852 = vadd.f32 %v812, %v847
    %v853 = vadd.f32 %v815, %v847
    %v854 = vadd.f32 %v818, %v847
    %v855 = vadd.f32 %v821, %v847
    %v856 = vadd.f32 %v824, %v847
    %v857 = vadd.f32 %v827, %v847
    %v858 = vadd.f32 %v830, %v847
    %v859 = vadd.f32 %v833, %v847
    %v860 = vadd.f32 %v836, %v847
    %v861 = vadd.f32 %v839, %v847
    %v862 = vadd.f32 %v842, %v847
    %v863 = vadd.f32 %v845, %v847
    %v880 = vlaneseq
    %v881 = vand.u32 %v880, 127
    %v882 = vlaneseq
    %v883 = vshrl.u32 %v882, 7
    %v884 = vsub.s32 %v881, %v883
    %v885 = vrot.slane %v848, %v884
    %v886 = vadd.s32 %v881, 4294967288
    %v887 = vlaneseq
    %v888 = vshrl.u32 %v887, 7
    %v889 = vsub.s32 %v886, %v888
    %v890 = vrot.slane %v849, %v889
    %vm891 = vcmask 130112
    %v892 = vsel %vm891, %v890, %v885
    %v893 = vadd.s32 %v881, 4294967280
    %v894 = vlaneseq
    %v895 = vshrl.u32 %v894, 7
    %v896 = vsub.s32 %v893, %v895
    %v897 = vrot.slane %v850, %v896
    %vm898 = vcmask 195712
    %v899 = vsel %vm898, %v897, %v892
    %v900 = vadd.s32 %v881, 4294967272
    %v901 = vlaneseq
    %v902 = vshrl.u32 %v901, 7
    %v903 = vsub.s32 %v900, %v902
    %v904 = vrot.slane %v851, %v903
    %vm905 = vcmask 261312
    %v906 = vsel %vm905, %v904, %v899
    %v907 = vadd.s32 %v881, 4294967264
    %v908 = vlaneseq
    %v909 = vshrl.u32 %v908, 7
    %v910 = vsub.s32 %v907, %v909
    %v911 = vrot.slane %v852, %v910
    %vm912 = vcmask 326912
    %v913 = vsel %vm912, %v911, %v906
    %v914 = vadd.s32 %v881, 4294967256
    %v915 = vlaneseq
    %v916 = vshrl.u32 %v915, 7
    %v917 = vsub.s32 %v914, %v916
    %v918 = vrot.slane %v853, %v917
    %vm919 = vcmask 392512
    %v920 = vsel %vm919, %v918, %v913
    %v921 = vadd.s32 %v881, 4294967248
    %v922 = vlaneseq
    %v923 = vshrl.u32 %v922, 7
    %v924 = vsub.s32 %v921, %v923
    %v925 = vrot.slane %v854, %v924
    %vm926 = vcmask 458112
    %v927 = vsel %vm926, %v925, %v920
    %v928 = vadd.s32 %v881, 4294967240
    %v929 = vlaneseq
    %v930 = vshrl.u32 %v929, 7
    %v931 = vsub.s32 %v928, %v930
    %v932 = vrot.slane %v855, %v931
    %vm933 = vcmask 523712
    %v934 = vsel %vm933, %v932, %v927
    %v935 = vadd.s32 %v881, 4294967232
    %v936 = vlaneseq
    %v937 = vshrl.u32 %v936, 7
    %v938 = vsub.s32 %v935, %v937
    %v939 = vrot.slane %v856, %v938
    %vm940 = vcmask 589312
    %v941 = vsel %vm940, %v939, %v934
    %v942 = vadd.s32 %v881, 4294967224
    %v943 = vlaneseq
    %v944 = vshrl.u32 %v943, 7
    %v945 = vsub.s32 %v942, %v944
    %v946 = vrot.slane %v857, %v945
    %vm947 = vcmask 654912
    %v948 = vsel %vm947, %v946, %v941
    %v949 = vadd.s32 %v881, 4294967216
    %v950 = vlaneseq
    %v951 = vshrl.u32 %v950, 7
    %v952 = vsub.s32 %v949, %v951
    %v953 = vrot.slane %v858, %v952
    %vm954 = vcmask 720512
    %v955 = vsel %vm954, %v953, %v948
    %v956 = vadd.s32 %v881, 4294967208
    %v957 = vlaneseq
    %v958 = vshrl.u32 %v957, 7
    %v959 = vsub.s32 %v956, %v958
    %v960 = vrot.slane %v859, %v959
    %vm961 = vcmask 786112
    %v962 = vsel %vm961, %v960, %v955
    %v963 = vadd.s32 %v881, 4294967200
    %v964 = vlaneseq
    %v965 = vshrl.u32 %v964, 7
    %v966 = vsub.s32 %v963, %v965
    %v967 = vrot.slane %v860, %v966
    %vm968 = vcmask 851712
    %v969 = vsel %vm968, %v967, %v962
    %v970 = vadd.s32 %v881, 4294967192
    %v971 = vlaneseq
    %v972 = vshrl.u32 %v971, 7
    %v973 = vsub.s32 %v970, %v972
    %v974 = vrot.slane %v861, %v973
    %vm975 = vcmask 917312
    %v976 = vsel %vm975, %v974, %v969
    %v977 = vadd.s32 %v881, 4294967184
    %v978 = vlaneseq
    %v979 = vshrl.u32 %v978, 7
    %v980 = vsub.s32 %v977, %v979
    %v981 = vrot.slane %v862, %v980
    %vm982 = vcmask 982912
    %v983 = vsel %vm982, %v981, %v976
    %v984 = vadd.s32 %v881, 4294967176
    %v985 = vlaneseq
    %v986 = vshrl.u32 %v985, 7
    %v987 = vsub.s32 %v984, %v986
    %v988 = vrot.slane %v863, %v987
    %vm989 = vcmask 1048512
    %v990 = vsel %vm989, %v988, %v983
    %992 = vst [vmem:[#allocation12] sm:$0x1] %v990
    // Predicated region
    $region50: #{tpu_custom_call.1} parent=1 // pred_check
      _
    $region51: #{tpu_custom_call.1} parent=1 // pred_check_branch
      %994 = sbr.rel (0) target = $region53
    $region52: #{tpu_custom_call.1} parent=1 // pred_region
      %s996 = ssub.s32 16, 16
      %997 = vsyncadd [#allocation6], %s996
      %s999 = sshll.u32 [#allocation12], 4
      %s1000 = int_to_ptr.vmem [resolvable:$true] %s999
      %1002 = dma.vmem_to_hbm [thread:$0]  %s1000, 16, %s8, [#allocation6]
    $region53: #{tpu_custom_call.1} parent=1 // pred_fallthru
      _
    // Predicated region
    $region54: #{tpu_custom_call.1} parent=1 // pred_check
      _
    $region55: #{tpu_custom_call.1} parent=1 // pred_check_branch
      %1004 = sbr.rel (0) target = $region57
    $region56: #{tpu_custom_call.1} parent=1 // pred_region
      %1005 = dma.done [#allocation6], 16
    $region57: #{tpu_custom_call.1} parent=1 // pred_fallthru
      _
    %1006 = vsyncpa [#allocation5], 1
    %1007 = vsyncpa [#allocation8], 1
    %1008 = vsyncpa [#allocation11], 1
    %1009 = vsyncpa [#allocation6], 1

</llo_original>
